<compile_context>
chip_gen: v7x
topology: tpu7x:2x2x1
jax: 0.10.0
libtpu: 0.0.40
codegen_flags: <defaults>
</compile_context>

<pallas_src>
import jax
import jax.numpy as jnp
import numpy as np
from jax.experimental import pallas as pl
from jax.experimental.pallas import tpu as pltpu


_MAX_BATCH_BLOCK = 32     # bound on the static per-step unroll of the N-side
_TARGET_ROWS = 1024       # target M for the fused D-side matmul


def _dft_matrices(n: int, d: int, dtype):
    """Concatenated DFT matrices: [C_D | S_D] (D,2D) and [C_N | -S_N] (N,2N)."""
    kn = np.arange(n)
    ang_n = 2.0 * np.pi * np.outer(kn, kn) / n
    kd = np.arange(d)
    ang_d = 2.0 * np.pi * np.outer(kd, kd) / d
    cdsd = np.concatenate([np.cos(ang_d), np.sin(ang_d)], axis=1)    # (D, 2D)
    cnsn = np.concatenate([np.cos(ang_n), -np.sin(ang_n)], axis=1)   # (N, 2N)
    return jnp.asarray(cdsd, dtype=dtype), jnp.asarray(cnsn, dtype=dtype)


def _pick_batch_block(b: int, n: int) -> int:
    """Largest divisor of B that keeps B_blk*N near the MXU-friendly target."""
    best = 1
    for cand in range(1, b + 1):
        if b % cand == 0 and cand <= _MAX_BATCH_BLOCK and cand * n <= _TARGET_ROWS:
            best = cand
    return best


def _fnet_kernel(x_ref, cdsd_ref, cnsn_ref, o_ref, w_ref):
    # x_ref:    (B_blk, N, D)
    # cdsd_ref: (D, 2D)   = [C_D | S_D]
    # cnsn_ref: (N, 2N)   = [C_N | -S_N]
    # w_ref:    (B_blk, 2N, D) VMEM scratch
    bb, n, d = x_ref.shape

    # ---- D-side: one big matmul, M = B_blk * N ---------------------------
    x2 = x_ref[...].astype(cdsd_ref.dtype).reshape(bb * n, d)
    z = jnp.dot(x2, cdsd_ref[...], preferred_element_type=jnp.float32)
    z = z.reshape(bb, n, 2 * d)            # [:, :, :d] = x@C_D ; [:, :, d:] = x@S_D

    # Restack the cos/sin halves along the contraction (sequence) axis:
    #   w[b] = [[ (x C_D)[b] ],
    #           [ (x S_D)[b] ]]            shape (2N, D)
    w_ref[:, :n, :] = z[:, :, :d].astype(w_ref.dtype)
    w_ref[:, n:, :] = z[:, :, d:].astype(w_ref.dtype)

    # ---- N-side + subtraction fused: [C_N | -S_N] @ w[b], per batch row --
    # bb is a small static unroll (<= _MAX_BATCH_BLOCK); C_N/S_N stay
    # resident as MXU weights across the back-to-back matmuls.
    for b in range(bb):
        o_ref[b] = jnp.dot(cnsn_ref[...], w_ref[b],
                           preferred_element_type=jnp.float32
                           ).astype(o_ref.dtype)


def fnet_block(x: jax.Array, *, compute_dtype=jnp.float32) -> jax.Array:
    """Real part of the 2-D FFT over the last two axes of x, via Pallas."""
    B, N, D = x.shape
    cdsd, cnsn = _dft_matrices(N, D, compute_dtype)
    b_blk = _pick_batch_block(B, N)
    grid = (B // b_blk,)

    itemsize_c = jnp.dtype(compute_dtype).itemsize
    itemsize_x = jnp.dtype(x.dtype).itemsize

    # --- VMEM budget (double-buffered x/out blocks, resident constants,
    #     scratch, f32 matmul intermediates) + headroom; capped at 64 MiB so
    #     it is safe on v7x's smaller VMEM. ---------------------------------
    blk_io = b_blk * N * D * itemsize_x
    const_bytes = (D * 2 * D + N * 2 * N) * itemsize_c
    scratch_bytes = b_blk * 2 * N * D * itemsize_c
    interm_bytes = b_blk * N * 2 * D * 4
    est = 4 * blk_io + 2 * const_bytes + scratch_bytes + 2 * interm_bytes
    vmem_limit = int(min(max(2 * est + (8 << 20), 32 << 20), 64 << 20))

    # --- Cost estimate for the XLA scheduler ------------------------------
    flops = 4 * B * N * D * (D + N)        # D-side: 4*B*N*D^2, N-side: 4*B*N^2*D
    bytes_accessed = (2 * B * N * D * itemsize_x
                      + (D * 2 * D + N * 2 * N) * itemsize_c)
    cost = pl.CostEstimate(flops=int(flops), transcendentals=0,
                           bytes_accessed=int(bytes_accessed))

    grid_spec = pltpu.PrefetchScalarGridSpec(
        num_scalar_prefetch=0,
        grid=grid,
        in_specs=[
            pl.BlockSpec((b_blk, N, D), lambda i: (i, 0, 0)),   # x batch block
            # Constant DFT matrices: constant index_map, VMEM-resident.
            # (A further saving would be pipeline_mode=pl.Buffered(1) to drop
            #  their second pipeline buffer; left at default for portability.)
            pl.BlockSpec((D, 2 * D), lambda i: (0, 0)),         # [C_D |  S_D]
            pl.BlockSpec((N, 2 * N), lambda i: (0, 0)),         # [C_N | -S_N]
        ],
        out_specs=pl.BlockSpec((b_blk, N, D), lambda i: (i, 0, 0)),
        scratch_shapes=[pltpu.VMEM((b_blk, 2 * N, D), compute_dtype)],
    )

    return pl.pallas_call(
        _fnet_kernel,
        out_shape=jax.ShapeDtypeStruct((B, N, D), x.dtype),
        grid_spec=grid_spec,
        compiler_params=pltpu.CompilerParams(
            dimension_semantics=("parallel",),
            vmem_limit_bytes=vmem_limit),
        cost_estimate=cost,
    )(x, cdsd, cnsn)


if __name__ == "__main__":
    # Small shapes consistent with FNet usage: batch=2, seq=8, hidden=dim=64.
    B, N, D = 2, 8, 64
    key = jax.random.PRNGKey(0)
    x = jax.random.normal(key, (B, N, D), dtype=jnp.float32)

    out = jax.block_until_ready(fnet_block(x))

    # Reference: real part of the full 2-D FFT over the last two axes.
    ref = jnp.fft.fft2(x, axes=(-2, -1)).real
    np.testing.assert_allclose(np.asarray(out), np.asarray(ref),
                               rtol=2e-4, atol=2e-4)
    print("KERNEL_OK")
</pallas_src>

<mosaic_0001>
module attributes {stable_mosaic.version = 11 : i64} {
  func.func @_fnet_kernel(%arg0: i32, %arg1: memref<2x8x64xf32, #tpu.memory_space<vmem>>, %arg2: memref<64x128xf32, #tpu.memory_space<vmem>>, %arg3: memref<8x16xf32, #tpu.memory_space<vmem>>, %arg4: memref<2x8x64xf32, #tpu.memory_space<vmem>>, %arg5: memref<2x16x64xf32, #tpu.memory_space<vmem>>) attributes {dimension_semantics = [#tpu.dimension_semantics<parallel>], iteration_bounds = array<i64: 1>, scalar_prefetch = 0 : i64, scratch_operands = 1 : i64, tpu.core_type = #tpu.core_type<tc>, window_params = [{transform_indices = @transform_0, window_bounds = array<i64: 2, 8, 64>}, {pipeline_mode = #tpu.pipeline_mode<synchronous>, transform_indices = @transform_1, window_bounds = array<i64: 64, 128>}, {pipeline_mode = #tpu.pipeline_mode<synchronous>, transform_indices = @transform_2, window_bounds = array<i64: 8, 16>}, {transform_indices = @transform_3, window_bounds = array<i64: 2, 8, 64>}]} {
    %c0 = arith.constant 0 : index
    %c0_0 = arith.constant 0 : index
    %c0_1 = arith.constant 0 : index
    %0 = vector.load %arg1[%c0, %c0_0, %c0_1] : memref<2x8x64xf32, #tpu.memory_space<vmem>>, vector<2x8x64xf32>
    %1 = vector.shape_cast %0 : vector<2x8x64xf32> to vector<16x64xf32>
    %c0_2 = arith.constant 0 : index
    %c0_3 = arith.constant 0 : index
    %2 = vector.load %arg2[%c0_2, %c0_3] : memref<64x128xf32, #tpu.memory_space<vmem>>, vector<64x128xf32>
    %cst = arith.constant dense<0.000000e+00> : vector<16x128xf32>
    %3 = tpu.matmul %1, %2, %cst {dimension_numbers = #tpu.dot_dimension_numbers<[1], [0], [0], [1], [0, 0, 1, 1], [], []>} : vector<16x64xf32>, vector<64x128xf32>, vector<16x128xf32> -> vector<16x128xf32>
    %4 = vector.shape_cast %3 : vector<16x128xf32> to vector<2x8x128xf32>
    %5 = vector.extract_strided_slice %4 {offsets = [0, 0, 0], sizes = [2, 8, 64], strides = [1, 1, 1]} : vector<2x8x128xf32> to vector<2x8x64xf32>
    %c0_4 = arith.constant 0 : index
    %c0_5 = arith.constant 0 : index
    %c0_6 = arith.constant 0 : index
    %6 = vector.load %arg5[%c0_4, %c0_5, %c0_6] : memref<2x16x64xf32, #tpu.memory_space<vmem>>, vector<2x8x64xf32>
    tpu.vector_store %arg5[%c0_4, %c0_5, %c0_6], %5 {strides = array<i32>} : memref<2x16x64xf32, #tpu.memory_space<vmem>>, vector<2x8x64xf32>,
    %7 = vector.extract_strided_slice %4 {offsets = [0, 0, 64], sizes = [2, 8, 64], strides = [1, 1, 1]} : vector<2x8x128xf32> to vector<2x8x64xf32>
    %c0_7 = arith.constant 0 : index
    %c8 = arith.constant 8 : index
    %c0_8 = arith.constant 0 : index
    %8 = vector.load %arg5[%c0_7, %c8, %c0_8] : memref<2x16x64xf32, #tpu.memory_space<vmem>>, vector<2x8x64xf32>
    tpu.vector_store %arg5[%c0_7, %c8, %c0_8], %7 {strides = array<i32>} : memref<2x16x64xf32, #tpu.memory_space<vmem>>, vector<2x8x64xf32>,
    %c0_9 = arith.constant 0 : index
    %c0_10 = arith.constant 0 : index
    %9 = vector.load %arg3[%c0_9, %c0_10] : memref<8x16xf32, #tpu.memory_space<vmem>>, vector<8x16xf32>
    %c0_11 = arith.constant 0 : index
    %c0_12 = arith.constant 0 : index
    %c0_13 = arith.constant 0 : index
    %10 = vector.load %arg5[%c0_11, %c0_12, %c0_13] : memref<2x16x64xf32, #tpu.memory_space<vmem>>, vector<1x16x64xf32>
    %11 = vector.shape_cast %10 : vector<1x16x64xf32> to vector<16x64xf32>
    %cst_14 = arith.constant dense<0.000000e+00> : vector<8x64xf32>
    %12 = tpu.matmul %9, %11, %cst_14 {dimension_numbers = #tpu.dot_dimension_numbers<[1], [0], [0], [1], [0, 0, 1, 1], [], []>} : vector<8x16xf32>, vector<16x64xf32>, vector<8x64xf32> -> vector<8x64xf32>
    %c0_15 = arith.constant 0 : index
    %c0_16 = arith.constant 0 : index
    %c0_17 = arith.constant 0 : index
    %13 = vector.load %arg4[%c0_15, %c0_16, %c0_17] : memref<2x8x64xf32, #tpu.memory_space<vmem>>, vector<1x8x64xf32>
    %14 = vector.shape_cast %13 : vector<1x8x64xf32> to vector<8x64xf32>
    %15 = vector.shape_cast %12 : vector<8x64xf32> to vector<1x8x64xf32>
    tpu.vector_store %arg4[%c0_15, %c0_16, %c0_17], %15 {strides = array<i32>} : memref<2x8x64xf32, #tpu.memory_space<vmem>>, vector<1x8x64xf32>,
    %c0_18 = arith.constant 0 : index
    %c0_19 = arith.constant 0 : index
    %16 = vector.load %arg3[%c0_18, %c0_19] : memref<8x16xf32, #tpu.memory_space<vmem>>, vector<8x16xf32>
    %c1 = arith.constant 1 : index
    %c0_20 = arith.constant 0 : index
    %c0_21 = arith.constant 0 : index
    %17 = vector.load %arg5[%c1, %c0_20, %c0_21] : memref<2x16x64xf32, #tpu.memory_space<vmem>>, vector<1x16x64xf32>
    %18 = vector.shape_cast %17 : vector<1x16x64xf32> to vector<16x64xf32>
    %cst_22 = arith.constant dense<0.000000e+00> : vector<8x64xf32>
    %19 = tpu.matmul %16, %18, %cst_22 {dimension_numbers = #tpu.dot_dimension_numbers<[1], [0], [0], [1], [0, 0, 1, 1], [], []>} : vector<8x16xf32>, vector<16x64xf32>, vector<8x64xf32> -> vector<8x64xf32>
    %c1_23 = arith.constant 1 : index
    %c0_24 = arith.constant 0 : index
    %c0_25 = arith.constant 0 : index
    %20 = vector.load %arg4[%c1_23, %c0_24, %c0_25] : memref<2x8x64xf32, #tpu.memory_space<vmem>>, vector<1x8x64xf32>
    %21 = vector.shape_cast %20 : vector<1x8x64xf32> to vector<8x64xf32>
    %22 = vector.shape_cast %19 : vector<8x64xf32> to vector<1x8x64xf32>
    tpu.vector_store %arg4[%c1_23, %c0_24, %c0_25], %22 {strides = array<i32>} : memref<2x8x64xf32, #tpu.memory_space<vmem>>, vector<1x8x64xf32>,
    return
  }
  func.func @transform_0(%arg0: i32) -> (i32, i32, i32) {
    %c0_i32 = arith.constant 0 : i32
    %c0_i32_0 = arith.constant 0 : i32
    %c0_i32_1 = arith.constant 0 : i32
    return %arg0, %c0_i32, %c0_i32_0 : i32, i32, i32
  }
  func.func @transform_1(%arg0: i32) -> (i32, i32) {
    %c0_i32 = arith.constant 0 : i32
    %c0_i32_0 = arith.constant 0 : i32
    %c0_i32_1 = arith.constant 0 : i32
    return %c0_i32, %c0_i32_0 : i32, i32
  }
  func.func @transform_2(%arg0: i32) -> (i32, i32) {
    %c0_i32 = arith.constant 0 : i32
    %c0_i32_0 = arith.constant 0 : i32
    %c0_i32_1 = arith.constant 0 : i32
    return %c0_i32, %c0_i32_0 : i32, i32
  }
  func.func @transform_3(%arg0: i32) -> (i32, i32, i32) {
    %c0_i32 = arith.constant 0 : i32
    %c0_i32_0 = arith.constant 0 : i32
    %c0_i32_1 = arith.constant 0 : i32
    return %arg0, %c0_i32, %c0_i32_0 : i32, i32, i32
  }
}

</mosaic_0001>

<llo_original>
// kernel: tpu_custom_call.1
$region0: #{tpu_custom_call.1}
  #allocation0 [shape = 'u32[]', space=smem, size = 0x4, offset = 0x4, fixed_abs, tag = 'smem constant byte address 0x4 - core index']
  #allocation1 [shape = 'u32[144,128]{1,0:T(1,128)}', space=vmem, size = 0x12000, scoped, tag = 'internal scratch']
  #allocation2 [shape = 'f32[2,16,64]{2,1,0:T(8,128)}', space=vmem, size = 0x4000, scoped, tag = 'scratch operand']
  %s0 = inlined_call_operand.hbm [shape: f32[2,8,64], index: 0, kind: input, shape index: {}]
  %s1 = inlined_call_operand.hbm [shape: f32[64,128], index: 1, kind: input, shape index: {}]
  %s2 = inlined_call_operand.hbm [shape: f32[8,16], index: 2, kind: input, shape index: {}]
  %s3 = inlined_call_operand.hbm [shape: f32[2,8,64], index: 3, kind: output, shape index: {}]
  %s4 = sld [smem:[#allocation0]]
  $region34: #{tpu_custom_call.1} parent=0
    _
  %s6 = ssub.s32 1, %s4
  %s7 = scalar_select 0, %s6, %s4
  $region1: #{tpu_custom_call.1} parent=0
    #allocation3 [shape = 'u8[8192]{0}', space=vmem, size = 0x2000, scoped, tag = 'input window, operand 0, single buffered']
    #allocation4 [shape = 's32[1]{0}', space=sflag, size = 0x4, scoped, tag = 'scoped memory for tpu_custom_call.1']
    #allocation5 [shape = 's32[1]{0}', space=sflag, size = 0x4, scoped, tag = 'scoped memory for tpu_custom_call.1']
    #allocation6 [shape = 'u8[32768]{0}', space=vmem, size = 0x8000, scoped, tag = 'input window, operand 1, single buffered']
    #allocation7 [shape = 's32[1]{0}', space=sflag, size = 0x4, scoped, tag = 'scoped memory for tpu_custom_call.1']
    #allocation8 [shape = 'u8[4096]{0}', space=vmem, size = 0x1000, scoped, tag = 'input window, operand 2, single buffered']
    #allocation9 [shape = 'u8[8192]{0}', space=vmem, size = 0x2000, scoped, tag = 'output window, operand 0, single buffered']
    %8 = vsyncpa [#allocation4], 0
    %9 = vsyncpa [#allocation7], 0
    %10 = vsyncpa [#allocation5], 0
    // Predicated region
    $region2: #{tpu_custom_call.1} parent=1 // pred_check
      _
    $region3: #{tpu_custom_call.1} parent=1 // pred_check_branch
      %12 = sbr.rel (0) target = $region5
    $region4: #{tpu_custom_call.1} parent=1 // pred_region
      %s14 = ssub.s32 256, 256
      %15 = vsyncadd [#allocation4], %s14
      %s16 = sshll.u32 [#allocation3], 4
      %s17 = int_to_ptr.vmem [resolvable:$true] %s16
      %22 = dma.hbm_to_vmem [thread:$0]  %s0, 256, %s17, [#allocation4], 128, 128, 8
    $region5: #{tpu_custom_call.1} parent=1 // pred_fallthru
      _
    // Predicated region
    $region6: #{tpu_custom_call.1} parent=1 // pred_check
      _
    $region7: #{tpu_custom_call.1} parent=1 // pred_check_branch
      %24 = sbr.rel (0) target = $region9
    $region8: #{tpu_custom_call.1} parent=1 // pred_region
      %s26 = ssub.s32 1024, 1024
      %27 = vsyncadd [#allocation7], %s26
      %s28 = sshll.u32 [#allocation6], 4
      %s29 = int_to_ptr.vmem [resolvable:$true] %s28
      %34 = dma.hbm_to_vmem [thread:$0]  %s1, 1024, %s29, [#allocation7], 128, 128, 8
    $region9: #{tpu_custom_call.1} parent=1 // pred_fallthru
      _
    // Predicated region
    $region10: #{tpu_custom_call.1} parent=1 // pred_check
      _
    $region11: #{tpu_custom_call.1} parent=1 // pred_check_branch
      %36 = sbr.rel (0) target = $region13
    $region12: #{tpu_custom_call.1} parent=1 // pred_region
      %s38 = ssub.s32 128, 128
      %39 = vsyncadd [#allocation7], %s38
      %s41 = sshll.u32 [#allocation8], 4
      %s42 = int_to_ptr.vmem [resolvable:$true] %s41
      %44 = dma.hbm_to_vmem [thread:$0]  %s2, 128, %s42, [#allocation7]
    $region13: #{tpu_custom_call.1} parent=1 // pred_fallthru
      _
    // Predicated region
    $region14: #{tpu_custom_call.1} parent=1 // pred_check
      _
    $region15: #{tpu_custom_call.1} parent=1 // pred_check_branch
      %46 = sbr.rel (0) target = $region17
    $region16: #{tpu_custom_call.1} parent=1 // pred_region
      %47 = dma.done [#allocation4], 256
    $region17: #{tpu_custom_call.1} parent=1 // pred_fallthru
      _
    // Predicated region
    $region18: #{tpu_custom_call.1} parent=1 // pred_check
      _
    $region19: #{tpu_custom_call.1} parent=1 // pred_check_branch
      %49 = sbr.rel (0) target = $region21
    $region20: #{tpu_custom_call.1} parent=1 // pred_region
      %50 = dma.done [#allocation7], 1024
    $region21: #{tpu_custom_call.1} parent=1 // pred_fallthru
      _
    // Predicated region
    $region22: #{tpu_custom_call.1} parent=1 // pred_check
      _
    $region23: #{tpu_custom_call.1} parent=1 // pred_check_branch
      %52 = sbr.rel (0) target = $region25
    $region24: #{tpu_custom_call.1} parent=1 // pred_region
      %53 = dma.done [#allocation7], 128
    $region25: #{tpu_custom_call.1} parent=1 // pred_fallthru
      _
    %v54 = vld [vmem:[#allocation3] sm:$0xff]
    %v55 = vld [vmem:[#allocation3 + $0x8] sm:$0xff]
    %v56 = vld [vmem:[#allocation6] sm:$0xff]
    %v57 = vld [vmem:[#allocation6 + $0x8] sm:$0xff]
    %v58 = vld [vmem:[#allocation6 + $0x10] sm:$0xff]
    %v59 = vld [vmem:[#allocation6 + $0x18] sm:$0xff]
    %v60 = vld [vmem:[#allocation6 + $0x20] sm:$0xff]
    %v61 = vld [vmem:[#allocation6 + $0x28] sm:$0xff]
    %v62 = vld [vmem:[#allocation6 + $0x30] sm:$0xff]
    %v63 = vld [vmem:[#allocation6 + $0x38] sm:$0xff]
    %vm64 = vcmask 523264
    %v66 = vsel %vm64, %v54, 0
    %v69 = vsel %vm64, %v55, 0
    %71 = vmatprep.subr.mxu0 0.0
    %72 = vmatpush1.msra.mxu0 %v56
    %73 = vmatprep.subr.mxu0 0.0
    %74 = vmatpush1.msra.mxu0 %v57
    %75 = vmatprep.subr.mxu0 0.0
    %76 = vmatpush1.msra.mxu0 %v58
    %77 = vmatprep.subr.mxu0 0.0
    %78 = vmatpush1.msra.mxu0 %v59
    %79 = vmatprep.subr.mxu0 0.0
    %80 = vmatpush1.msra.mxu0 %v60
    %81 = vmatprep.subr.mxu0 0.0
    %82 = vmatpush1.msra.mxu0 %v61
    %83 = vmatprep.subr.mxu0 0.0
    %84 = vmatpush1.msra.mxu0 %v62
    %85 = vmatprep.subr.mxu0 0.0
    %86 = vmatpush1.msra.mxu0 %v63
    %87 = vmatprep.subr.mxu0 0.0
    %88 = vmatpush1.msra.mxu0 0.0
    %89 = vmatprep.subr.mxu0 0.0
    %90 = vmatpush1.msra.mxu0 0.0
    %91 = vmatprep.subr.mxu0 0.0
    %92 = vmatpush1.msra.mxu0 0.0
    %93 = vmatprep.subr.mxu0 0.0
    %94 = vmatpush1.msra.mxu0 0.0
    %95 = vmatprep.subr.mxu0 0.0
    %96 = vmatpush1.msra.mxu0 0.0
    %97 = vmatprep.subr.mxu0 0.0
    %98 = vmatpush1.msra.mxu0 0.0
    %99 = vmatprep.subr.mxu0 0.0
    %100 = vmatpush1.msra.mxu0 0.0
    %101 = vmatprep.subr.mxu0 0.0
    %102 = vmatpush1.msra.mxu0 0.0
    %103 = vmatprep.subr.mxu0 0.0
    %104 = vmatpush1.msra.mxu0 0.0
    %105 = vmatprep.subr.mxu0 0.0
    %106 = vmatpush1.msra.mxu0 0.0
    %107 = vmatprep.subr.mxu0 0.0
    %108 = vmatpush1.msra.mxu0 0.0
    %109 = vmatprep.subr.mxu0 0.0
    %110 = vmatpush1.msra.mxu0 0.0
    %111 = vmatprep.subr.mxu0 0.0
    %112 = vmatpush1.msra.mxu0 0.0
    %113 = vmatprep.subr.mxu0 0.0
    %114 = vmatpush1.msra.mxu0 0.0
    %115 = vmatprep.subr.mxu0 0.0
    %116 = vmatpush1.msra.mxu0 0.0
    %117 = vmatprep.subr.mxu0 0.0
    %118 = vmatpush1.msra.mxu0 0.0
    %119 = vmatprep.subr.mxu0 0.0
    %120 = vmatpush1.msra.mxu0 0.0
    %121 = vmatprep.subr.mxu0 0.0
    %122 = vmatpush1.msra.mxu0 0.0
    %123 = vmatprep.subr.mxu0 0.0
    %124 = vmatpush1.msra.mxu0 0.0
    %125 = vmatprep.subr.mxu0 0.0
    %126 = vmatpush1.msra.mxu0 0.0
    %127 = vmatprep.subr.mxu0 0.0
    %128 = vmatpush1.msra.mxu0 0.0
    %129 = vmatprep.subr.mxu0 0.0
    %130 = vmatpush1.msra.mxu0 0.0
    %131 = vmatprep.subr.mxu0 0.0
    %132 = vmatpush1.msra.mxu0 0.0
    %133 = vmatprep.subr.mxu0 0.0
    %134 = vmatpush1.msra.mxu0 0.0
    %135 = vmatprep.mubr.f32.mxu0 0.0
    %136 = vmatmul.mubr.f32.gmra.mrb[0].mxu0 %v66
    %v137 = vpop.f32.mrb[0].mxu0
    %v138 = vadd.f32 0.0, %v137
    %v139 = vpop.f32.mrb[0].mxu0
    %140 = vmatprep.mubr.f32.mxu0 0.0
    %141 = vmatmul.mubr.f32.gmra.mrb[0].mxu0 %v69
    %v142 = vpop.f32.mrb[0].mxu0
    %v143 = vadd.f32 0.0, %v142
    %v144 = vpop.f32.mrb[0].mxu0
    %145 = vdwg.mxu0
    %146 = vst.msk [vmem:[#allocation2] sm:$0xff] %vm64, %v138
    %147 = vst.msk [vmem:[#allocation2 + $0x10] sm:$0xff] %vm64, %v143
    %150 = vrot.lane.b32.xlu0 %v138, 64
    %v151 = vpop.permute.xlu0 %150
    %152 = vrot.lane.b32.xlu0 %v143, 64
    %v153 = vpop.permute.xlu0 %152
    %156 = vst.msk [vmem:[#allocation2 + $0x8] sm:$0xff] %vm64, %v151
    %157 = vst.msk [vmem:[#allocation2 + $0x18] sm:$0xff] %vm64, %v153
    %v158 = vld [vmem:[#allocation8] sm:$0xff]
    %v159 = vld [vmem:[#allocation2] sm:$0xff]
    %v160 = vld [vmem:[#allocation2 + $0x8] sm:$0xff]
    %vm161 = vcmask 130048
    %v163 = vsel %vm161, %v158, 0
    %165 = vmatprep.subr.mxu0 0.0
    %166 = vmatpush1.msra.mxu0 %v159
    %167 = vmatprep.subr.mxu0 0.0
    %168 = vmatpush1.msra.mxu0 %v160
    %169 = vmatprep.subr.mxu0 0.0
    %170 = vmatpush1.msra.mxu0 0.0
    %171 = vmatprep.subr.mxu0 0.0
    %172 = vmatpush1.msra.mxu0 0.0
    %173 = vmatprep.subr.mxu0 0.0
    %174 = vmatpush1.msra.mxu0 0.0
    %175 = vmatprep.subr.mxu0 0.0
    %176 = vmatpush1.msra.mxu0 0.0
    %177 = vmatprep.subr.mxu0 0.0
    %178 = vmatpush1.msra.mxu0 0.0
    %179 = vmatprep.subr.mxu0 0.0
    %180 = vmatpush1.msra.mxu0 0.0
    %181 = vmatprep.subr.mxu0 0.0
    %182 = vmatpush1.msra.mxu0 0.0
    %183 = vmatprep.subr.mxu0 0.0
    %184 = vmatpush1.msra.mxu0 0.0
    %185 = vmatprep.subr.mxu0 0.0
    %186 = vmatpush1.msra.mxu0 0.0
    %187 = vmatprep.subr.mxu0 0.0
    %188 = vmatpush1.msra.mxu0 0.0
    %189 = vmatprep.subr.mxu0 0.0
    %190 = vmatpush1.msra.mxu0 0.0
    %191 = vmatprep.subr.mxu0 0.0
    %192 = vmatpush1.msra.mxu0 0.0
    %193 = vmatprep.subr.mxu0 0.0
    %194 = vmatpush1.msra.mxu0 0.0
    %195 = vmatprep.subr.mxu0 0.0
    %196 = vmatpush1.msra.mxu0 0.0
    %197 = vmatprep.subr.mxu0 0.0
    %198 = vmatpush1.msra.mxu0 0.0
    %199 = vmatprep.subr.mxu0 0.0
    %200 = vmatpush1.msra.mxu0 0.0
    %201 = vmatprep.subr.mxu0 0.0
    %202 = vmatpush1.msra.mxu0 0.0
    %203 = vmatprep.subr.mxu0 0.0
    %204 = vmatpush1.msra.mxu0 0.0
    %205 = vmatprep.subr.mxu0 0.0
    %206 = vmatpush1.msra.mxu0 0.0
    %207 = vmatprep.subr.mxu0 0.0
    %208 = vmatpush1.msra.mxu0 0.0
    %209 = vmatprep.subr.mxu0 0.0
    %210 = vmatpush1.msra.mxu0 0.0
    %211 = vmatprep.subr.mxu0 0.0
    %212 = vmatpush1.msra.mxu0 0.0
    %213 = vmatprep.subr.mxu0 0.0
    %214 = vmatpush1.msra.mxu0 0.0
    %215 = vmatprep.subr.mxu0 0.0
    %216 = vmatpush1.msra.mxu0 0.0
    %217 = vmatprep.subr.mxu0 0.0
    %218 = vmatpush1.msra.mxu0 0.0
    %219 = vmatprep.subr.mxu0 0.0
    %220 = vmatpush1.msra.mxu0 0.0
    %221 = vmatprep.subr.mxu0 0.0
    %222 = vmatpush1.msra.mxu0 0.0
    %223 = vmatprep.subr.mxu0 0.0
    %224 = vmatpush1.msra.mxu0 0.0
    %225 = vmatprep.subr.mxu0 0.0
    %226 = vmatpush1.msra.mxu0 0.0
    %227 = vmatprep.subr.mxu0 0.0
    %228 = vmatpush1.msra.mxu0 0.0
    %229 = vmatprep.mubr.f32.mxu0 0.0
    %230 = vmatmul.mubr.f32.gmra.mrb[0].mxu0 %v163
    %v231 = vpop.f32.mrb[0].mxu0
    %v232 = vadd.f32 0.0, %v231
    %v233 = vpop.f32.mrb[0].mxu0
    %234 = vdwg.mxu0
    %235 = vst.msk [vmem:[#allocation9] sm:$0xff] %vm64, %v232
    %v236 = vld [vmem:[#allocation8] sm:$0xff]
    %s237 = scalar_lea.vmem [#allocation2], 16
    %v238 = vld [vmem:[%s237] sm:$0xff]
    %v239 = vld [vmem:[%s237 + $0x8] sm:$0xff]
    %v241 = vsel %vm161, %v236, 0
    %243 = vmatprep.subr.mxu0 0.0
    %244 = vmatpush1.msra.mxu0 %v238
    %245 = vmatprep.subr.mxu0 0.0
    %246 = vmatpush1.msra.mxu0 %v239
    %247 = vmatprep.subr.mxu0 0.0
    %248 = vmatpush1.msra.mxu0 0.0
    %249 = vmatprep.subr.mxu0 0.0
    %250 = vmatpush1.msra.mxu0 0.0
    %251 = vmatprep.subr.mxu0 0.0
    %252 = vmatpush1.msra.mxu0 0.0
    %253 = vmatprep.subr.mxu0 0.0
    %254 = vmatpush1.msra.mxu0 0.0
    %255 = vmatprep.subr.mxu0 0.0
    %256 = vmatpush1.msra.mxu0 0.0
    %257 = vmatprep.subr.mxu0 0.0
    %258 = vmatpush1.msra.mxu0 0.0
    %259 = vmatprep.subr.mxu0 0.0
    %260 = vmatpush1.msra.mxu0 0.0
    %261 = vmatprep.subr.mxu0 0.0
    %262 = vmatpush1.msra.mxu0 0.0
    %263 = vmatprep.subr.mxu0 0.0
    %264 = vmatpush1.msra.mxu0 0.0
    %265 = vmatprep.subr.mxu0 0.0
    %266 = vmatpush1.msra.mxu0 0.0
    %267 = vmatprep.subr.mxu0 0.0
    %268 = vmatpush1.msra.mxu0 0.0
    %269 = vmatprep.subr.mxu0 0.0
    %270 = vmatpush1.msra.mxu0 0.0
    %271 = vmatprep.subr.mxu0 0.0
    %272 = vmatpush1.msra.mxu0 0.0
    %273 = vmatprep.subr.mxu0 0.0
    %274 = vmatpush1.msra.mxu0 0.0
    %275 = vmatprep.subr.mxu0 0.0
    %276 = vmatpush1.msra.mxu0 0.0
    %277 = vmatprep.subr.mxu0 0.0
    %278 = vmatpush1.msra.mxu0 0.0
    %279 = vmatprep.subr.mxu0 0.0
    %280 = vmatpush1.msra.mxu0 0.0
    %281 = vmatprep.subr.mxu0 0.0
    %282 = vmatpush1.msra.mxu0 0.0
    %283 = vmatprep.subr.mxu0 0.0
    %284 = vmatpush1.msra.mxu0 0.0
    %285 = vmatprep.subr.mxu0 0.0
    %286 = vmatpush1.msra.mxu0 0.0
    %287 = vmatprep.subr.mxu0 0.0
    %288 = vmatpush1.msra.mxu0 0.0
    %289 = vmatprep.subr.mxu0 0.0
    %290 = vmatpush1.msra.mxu0 0.0
    %291 = vmatprep.subr.mxu0 0.0
    %292 = vmatpush1.msra.mxu0 0.0
    %293 = vmatprep.subr.mxu0 0.0
    %294 = vmatpush1.msra.mxu0 0.0
    %295 = vmatprep.subr.mxu0 0.0
    %296 = vmatpush1.msra.mxu0 0.0
    %297 = vmatprep.subr.mxu0 0.0
    %298 = vmatpush1.msra.mxu0 0.0
    %299 = vmatprep.subr.mxu0 0.0
    %300 = vmatpush1.msra.mxu0 0.0
    %301 = vmatprep.subr.mxu0 0.0
    %302 = vmatpush1.msra.mxu0 0.0
    %303 = vmatprep.subr.mxu0 0.0
    %304 = vmatpush1.msra.mxu0 0.0
    %305 = vmatprep.subr.mxu0 0.0
    %306 = vmatpush1.msra.mxu0 0.0
    %307 = vmatprep.mubr.f32.mxu0 0.0
    %308 = vmatmul.mubr.f32.gmra.mrb[0].mxu0 %v241
    %v309 = vpop.f32.mrb[0].mxu0
    %v310 = vadd.f32 0.0, %v309
    %v311 = vpop.f32.mrb[0].mxu0
    %312 = vdwg.mxu0
    %s313 = scalar_lea.vmem [#allocation9], 8
    %314 = vst.msk [vmem:[%s313] sm:$0xff] %vm64, %v310
    // Predicated region
    $region26: #{tpu_custom_call.1} parent=1 // pred_check
      _
    $region27: #{tpu_custom_call.1} parent=1 // pred_check_branch
      %316 = sbr.rel (0) target = $region29
    $region28: #{tpu_custom_call.1} parent=1 // pred_region
      %s318 = ssub.s32 256, 256
      %319 = vsyncadd [#allocation5], %s318
      %s320 = sshll.u32 [#allocation9], 4
      %s321 = int_to_ptr.vmem [resolvable:$true] %s320
      %326 = dma.vmem_to_hbm [thread:$0]  %s321, 256, %s3, [#allocation5], 128, 128, 8
    $region29: #{tpu_custom_call.1} parent=1 // pred_fallthru
      _
    // Predicated region
    $region30: #{tpu_custom_call.1} parent=1 // pred_check
      _
    $region31: #{tpu_custom_call.1} parent=1 // pred_check_branch
      %328 = sbr.rel (0) target = $region33
    $region32: #{tpu_custom_call.1} parent=1 // pred_region
      %329 = dma.done [#allocation5], 256
    $region33: #{tpu_custom_call.1} parent=1 // pred_fallthru
      _
    %330 = vsyncpa [#allocation4], 1
    %331 = vsyncpa [#allocation7], 1
    %332 = vsyncpa [#allocation5], 1

</llo_original>
